<compile_context>
chip_gen: v6e
topology: v6e:2x2x1
jax: 0.10.0
libtpu: 0.0.40
codegen_flags: <defaults>
</compile_context>

<pallas_src>
import functools

import jax
import jax.numpy as jnp
from jax import lax
from jax.experimental import pallas as pl
from jax.experimental.pallas import tpu as pltpu


_TARGET_TILE_BYTES = 4 * 1024 * 1024    # ~4 MiB of lane-padded input per tile
_VMEM_LIMIT_BYTES = 32 * 1024 * 1024


def _round_up(x: int, m: int) -> int:
    return -(-x // m) * m


def _round_down(x: int, m: int) -> int:
    return (x // m) * m


def _jsd_partial_kernel(p_ref, q_ref, o_ref, *, tile_rows, slab_rows, out_rows,
                        width, rows_total, needs_mask):
    i = pl.program_id(0)
    # Rows of this block that hold real data; the remainder of the last block
    # is whatever the clipped edge DMA left in VMEM (garbage).
    rows_left = rows_total - i * tile_rows

    n_slabs = tile_rows // slab_rows
    groups = slab_rows // out_rows

    def slab_body(s, acc):
        r0 = pl.multiple_of(s * slab_rows, slab_rows)
        p = p_ref[pl.ds(r0, slab_rows), :].astype(jnp.float32)
        q = q_ref[pl.ds(r0, slab_rows), :].astype(jnp.float32)
        if needs_mask:
            row_ids = r0 + lax.broadcasted_iota(jnp.int32, (slab_rows, width), 0)
            valid = row_ids < rows_left
            # Substitute p = q = 1 BEFORE the logs: contributes exactly 0 to
            # the sum and keeps NaN/Inf from garbage tail rows out of it.
            p = jnp.where(valid, p, 1.0)
            q = jnp.where(valid, q, 1.0)
        s_pq = p + q
        log_m = jnp.log(0.5 * s_pq)                 # log(1.0) == 0 on masked rows
        # p*(log p - log m) + q*(log q - log m) == p*log p + q*log q - (p+q)*log m
        contrib = p * jnp.log(p) + q * jnp.log(q) - s_pq * log_m
        # Fold sublane groups together with pure VPU adds (different vregs,
        # same lane/sublane position -> no XLU work in the hot loop).
        part = contrib.reshape(groups, out_rows, width).sum(axis=0)
        return acc + part

    acc0 = jnp.zeros((out_rows, width), jnp.float32)
    unroll = True if n_slabs <= 4 else 4
    acc = lax.fori_loop(0, n_slabs, slab_body, acc0, unroll=unroll)
    o_ref[...] = acc


def jsd_pallas(p: jax.Array, q: jax.Array) -> jax.Array:
    """Jensen-Shannon divergence between probability tensors p and q.

    p, q: arrays of identical shape (..., C); interpreted as probabilities.
    Returns a scalar float32 (batchmean over N = prod(shape[:-1]) rows).
    """
    assert p.shape == q.shape, (p.shape, q.shape)
    c = p.shape[-1]
    total = p.size
    n_rows = total // c                      # batchmean denominator

    # Lane-dense 2-D view (rows, width): widest lane width that divides the
    # element count exactly (no padding / no extra HBM copies); fall back to
    # the natural class dim (block last dim == full dim is always legal).
    width = c
    for w in (512, 256, 128):
        if total % w == 0:
            width = w
            break
    rows = total // width

    itemsize = jnp.dtype(p.dtype).itemsize
    padded_row_bytes = _round_up(width, 128) * itemsize   # VMEM lane padding
    max_tile_rows = max(8, _round_down(_TARGET_TILE_BYTES // max(padded_row_bytes, 1), 32))

    if rows <= 8:
        tile_rows = rows                     # single tiny block, full dims
    else:
        # Never let the block's row count exceed the array (only the last
        # block may be ragged); aim for at least 2 blocks for v7x megacore.
        tile_rows = min(max_tile_rows,
                        _round_up(pl.cdiv(rows, 2), 32),
                        _round_down(rows, 8))
        g = pl.cdiv(rows, tile_rows)
        # Prefer an even block count for mid-size inputs (balanced v7x cores).
        if 2 < g <= 16 and g % 2 == 1:
            alt = min(max(32, _round_up(pl.cdiv(rows, g + 1), 32)),
                      _round_down(rows, 8))
            if pl.cdiv(rows, alt) % 2 == 0:
                tile_rows = alt

    grid_n = pl.cdiv(rows, tile_rows)
    needs_mask = (grid_n * tile_rows != rows)

    if tile_rows >= 32 and tile_rows % 32 == 0:
        slab_rows = 32
    elif tile_rows >= 16 and tile_rows % 16 == 0:
        slab_rows = 16
    elif tile_rows >= 8 and tile_rows % 8 == 0:
        slab_rows = 8
    else:
        slab_rows = tile_rows                # tiny (< 8 rows) path
    out_rows = min(8, slab_rows)

    p2 = p.reshape(rows, width)
    q2 = q.reshape(rows, width)

    kernel = functools.partial(
        _jsd_partial_kernel,
        tile_rows=tile_rows, slab_rows=slab_rows, out_rows=out_rows,
        width=width, rows_total=rows, needs_mask=needs_mask)

    partials = pl.pallas_call(
        kernel,
        out_shape=jax.ShapeDtypeStruct((grid_n, out_rows, width), jnp.float32),
        grid_spec=pltpu.PrefetchScalarGridSpec(
            num_scalar_prefetch=0,
            grid=(grid_n,),
            in_specs=[
                pl.BlockSpec((tile_rows, width), lambda i: (i, 0)),
                pl.BlockSpec((tile_rows, width), lambda i: (i, 0)),
            ],
            out_specs=pl.BlockSpec((None, out_rows, width), lambda i: (i, 0, 0)),
        ),
        compiler_params=pltpu.CompilerParams(
            dimension_semantics=("parallel",),
            vmem_limit_bytes=_VMEM_LIMIT_BYTES,
        ),
    )(p2, q2)

    # Tiny final reduction + 0.5 factor + batchmean normalization in plain JAX.
    return 0.5 * jnp.sum(partials, dtype=jnp.float32) / jnp.float32(n_rows)


def jsd_reference(p: jax.Array, q: jax.Array) -> jax.Array:
    c = p.shape[-1]
    p2 = p.reshape(-1, c).astype(jnp.float32)
    q2 = q.reshape(-1, c).astype(jnp.float32)
    n = p2.shape[0]
    m = jnp.log(0.5 * (p2 + q2))
    kl_pm = jnp.sum(p2 * (jnp.log(p2) - m)) / n
    kl_qm = jnp.sum(q2 * (jnp.log(q2) - m)) / n
    return 0.5 * (kl_pm + kl_qm)


if __name__ == "__main__":
    # Small shapes consistent with the forward: (batch, seq, classes) prob dists.
    batch, seq, classes = 2, 8, 32
    key = jax.random.PRNGKey(0)
    kp, kq = jax.random.split(key)

    p_logits = jax.random.normal(kp, (batch, seq, classes), dtype=jnp.float32)
    q_logits = jax.random.normal(kq, (batch, seq, classes), dtype=jnp.float32)
    p = jax.nn.softmax(p_logits, axis=-1)
    q = jax.nn.softmax(q_logits, axis=-1)

    out = jax.block_until_ready(jsd_pallas(p, q))
    ref = jax.block_until_ready(jsd_reference(p, q))
    assert jnp.allclose(out, ref, rtol=1e-4, atol=1e-6), (out, ref)

    # Ragged size exercising the multi-block + in-kernel tail-masking path
    # (element count not a multiple of 512; no jnp.pad anywhere).
    kp2, kq2 = jax.random.split(jax.random.PRNGKey(1))
    p2 = jax.nn.softmax(jax.random.normal(kp2, (4, 37, 96), jnp.float32), axis=-1)
    q2 = jax.nn.softmax(jax.random.normal(kq2, (4, 37, 96), jnp.float32), axis=-1)
    out2 = jax.block_until_ready(jsd_pallas(p2, q2))
    ref2 = jax.block_until_ready(jsd_reference(p2, q2))
    assert jnp.allclose(out2, ref2, rtol=1e-4, atol=1e-6), (out2, ref2)

    print("KERNEL_OK")
</pallas_src>

<mosaic_0001>
module attributes {stable_mosaic.version = 11 : i64} {
  func.func @_jsd_partial_kernel(%arg0: i32, %arg1: memref<1x512xf32, #tpu.memory_space<vmem>>, %arg2: memref<1x512xf32, #tpu.memory_space<vmem>>, %arg3: memref<1x1x512xf32, #tpu.memory_space<vmem>>) attributes {dimension_semantics = [#tpu.dimension_semantics<parallel>], iteration_bounds = array<i64: 1>, scalar_prefetch = 0 : i64, scratch_operands = 0 : i64, tpu.core_type = #tpu.core_type<tc>, window_params = [{transform_indices = @transform_0, window_bounds = array<i64: 1, 512>}, {transform_indices = @transform_1, window_bounds = array<i64: 1, 512>}, {transform_indices = @transform_2, window_bounds = array<i64: 1, 1, 512>}]} {
    %cst = arith.constant 0.000000e+00 : f32
    %0 = vector.broadcast %cst : f32 to vector<1x512xf32>
    %c0_i32 = arith.constant 0 : i32
    %c1_i32 = arith.constant 1 : i32
    %1 = arith.muli %c0_i32, %c1_i32 : i32
    %2 = tpu.assume_multiple %1, 1 : i32
    %3 = arith.index_cast %2 : i32 to index
    %c0 = arith.constant 0 : index
    %4 = vector.load %arg1[%3, %c0] : memref<1x512xf32, #tpu.memory_space<vmem>>, vector<1x512xf32>
    %5 = arith.index_cast %2 : i32 to index
    %c0_0 = arith.constant 0 : index
    %6 = vector.load %arg2[%5, %c0_0] : memref<1x512xf32, #tpu.memory_space<vmem>>, vector<1x512xf32>
    %7 = arith.addf %4, %6 : vector<1x512xf32>
    %cst_1 = arith.constant 5.000000e-01 : f32
    %8 = vector.broadcast %cst_1 : f32 to vector<1x512xf32>
    %9 = arith.mulf %8, %7 : vector<1x512xf32>
    %10 = math.log %9 : vector<1x512xf32>
    %11 = math.log %4 : vector<1x512xf32>
    %12 = arith.mulf %4, %11 : vector<1x512xf32>
    %13 = math.log %6 : vector<1x512xf32>
    %14 = arith.mulf %6, %13 : vector<1x512xf32>
    %15 = arith.addf %12, %14 : vector<1x512xf32>
    %16 = arith.mulf %7, %10 : vector<1x512xf32>
    %17 = arith.subf %15, %16 : vector<1x512xf32>
    %18 = vector.shape_cast %17 : vector<1x512xf32> to vector<1x1x512xf32>
    %cst_2 = arith.constant dense<0.000000e+00> : vector<1x512xf32>
    %19 = vector.multi_reduction <add>, %18, %cst_2 [0] : vector<1x1x512xf32> to vector<1x512xf32>
    %20 = arith.addf %0, %19 : vector<1x512xf32>
    %c1_i32_3 = arith.constant 1 : i32
    %c0_4 = arith.constant 0 : index
    %c0_5 = arith.constant 0 : index
    %c0_6 = arith.constant 0 : index
    %21 = vector.load %arg3[%c0_4, %c0_5, %c0_6] : memref<1x1x512xf32, #tpu.memory_space<vmem>>, vector<1x1x512xf32>
    %22 = vector.shape_cast %21 : vector<1x1x512xf32> to vector<1x512xf32>
    %23 = vector.shape_cast %20 : vector<1x512xf32> to vector<1x1x512xf32>
    tpu.vector_store %arg3[%c0_4, %c0_5, %c0_6], %23 {strides = array<i32>} : memref<1x1x512xf32, #tpu.memory_space<vmem>>, vector<1x1x512xf32>,
    return
  }
  func.func @transform_0(%arg0: i32) -> (i32, i32) {
    %c0_i32 = arith.constant 0 : i32
    %c0_i32_0 = arith.constant 0 : i32
    return %arg0, %c0_i32 : i32, i32
  }
  func.func @transform_1(%arg0: i32) -> (i32, i32) {
    %c0_i32 = arith.constant 0 : i32
    %c0_i32_0 = arith.constant 0 : i32
    return %arg0, %c0_i32 : i32, i32
  }
  func.func @transform_2(%arg0: i32) -> (i32, i32, i32) {
    %c0_i32 = arith.constant 0 : i32
    %c0_i32_0 = arith.constant 0 : i32
    %c0_i32_1 = arith.constant 0 : i32
    return %arg0, %c0_i32, %c0_i32_0 : i32, i32, i32
  }
}

</mosaic_0001>

<llo_original>
// kernel: tpu_custom_call.1
$region0: #{tpu_custom_call.1}
  #allocation0 [shape = 'u32[]', space=smem, size = 0x4, offset = 0x4, fixed_abs, tag = 'smem constant byte address 0x4 - core index']
  #allocation1 [shape = 'u32[144,128]{1,0:T(1,128)}', space=vmem, size = 0x12000, scoped, tag = 'internal scratch']
  %s0 = inlined_call_operand.hbm [shape: f32[1,512], index: 0, kind: input, shape index: {}]
  %s1 = inlined_call_operand.hbm [shape: f32[1,512], index: 1, kind: input, shape index: {}]
  %s2 = inlined_call_operand.hbm [shape: f32[1,1,512], index: 2, kind: output, shape index: {}]
  %s3 = sld [smem:[#allocation0]]
  $region26: #{tpu_custom_call.1} parent=0
    _
  %s5 = ssub.s32 1, %s3
  %s6 = scalar_select 0, %s5, %s3
  $region1: #{tpu_custom_call.1} parent=0
    #allocation2 [shape = 'u8[2048]{0}', space=vmem, size = 0x800, scoped, tag = 'input window, operand 0, single buffered']
    #allocation3 [shape = 's32[1]{0}', space=sflag, size = 0x4, scoped, tag = 'scoped memory for tpu_custom_call.1']
    #allocation4 [shape = 's32[1]{0}', space=sflag, size = 0x4, scoped, tag = 'scoped memory for tpu_custom_call.1']
    #allocation5 [shape = 'u8[2048]{0}', space=vmem, size = 0x800, scoped, tag = 'input window, operand 1, single buffered']
    #allocation6 [shape = 's32[1]{0}', space=sflag, size = 0x4, scoped, tag = 'scoped memory for tpu_custom_call.1']
    #allocation7 [shape = 'u8[2048]{0}', space=vmem, size = 0x800, scoped, tag = 'output window, operand 0, single buffered']
    %7 = vsyncpa [#allocation3], 0
    %8 = vsyncpa [#allocation6], 0
    %9 = vsyncpa [#allocation4], 0
    // Predicated region
    $region2: #{tpu_custom_call.1} parent=1 // pred_check
      _
    $region3: #{tpu_custom_call.1} parent=1 // pred_check_branch
      %11 = sbr.rel (0) target = $region5
    $region4: #{tpu_custom_call.1} parent=1 // pred_region
      %s13 = ssub.s32 64, 64
      %14 = vsyncadd [#allocation3], %s13
      %s16 = sshll.u32 [#allocation2], 4
      %s17 = int_to_ptr.vmem [resolvable:$true] %s16
      %19 = dma.hbm_to_vmem [thread:$0]  %s0, 64, %s17, [#allocation3]
    $region5: #{tpu_custom_call.1} parent=1 // pred_fallthru
      _
    // Predicated region
    $region6: #{tpu_custom_call.1} parent=1 // pred_check
      _
    $region7: #{tpu_custom_call.1} parent=1 // pred_check_branch
      %21 = sbr.rel (0) target = $region9
    $region8: #{tpu_custom_call.1} parent=1 // pred_region
      %s23 = ssub.s32 64, 64
      %24 = vsyncadd [#allocation6], %s23
      %s26 = sshll.u32 [#allocation5], 4
      %s27 = int_to_ptr.vmem [resolvable:$true] %s26
      %29 = dma.hbm_to_vmem [thread:$0]  %s1, 64, %s27, [#allocation6]
    $region9: #{tpu_custom_call.1} parent=1 // pred_fallthru
      _
    // Predicated region
    $region10: #{tpu_custom_call.1} parent=1 // pred_check
      _
    $region11: #{tpu_custom_call.1} parent=1 // pred_check_branch
      %31 = sbr.rel (0) target = $region13
    $region12: #{tpu_custom_call.1} parent=1 // pred_region
      %32 = dma.done [#allocation3], 64
    $region13: #{tpu_custom_call.1} parent=1 // pred_fallthru
      _
    // Predicated region
    $region14: #{tpu_custom_call.1} parent=1 // pred_check
      _
    $region15: #{tpu_custom_call.1} parent=1 // pred_check_branch
      %34 = sbr.rel (0) target = $region17
    $region16: #{tpu_custom_call.1} parent=1 // pred_region
      %35 = dma.done [#allocation6], 64
    $region17: #{tpu_custom_call.1} parent=1 // pred_fallthru
      _
    %s36 = smul.u32 0, 4
    %s37 = scalar_lea.vmem [#allocation2], %s36
    %v38 = vld [vmem:[%s37] sm:$0xf]
    %s39 = scalar_lea.vmem [#allocation5], %s36
    %v40 = vld [vmem:[%s39] sm:$0xf]
    %v41 = vadd.f32 %v38, %v40
    %v42 = vmul.f32 %v41, 0.5
    %v43 = vlog2.pop %v42
    %v44 = vmul.f32 %v43, 0.6931472
    %v45 = vlog2.pop %v38
    %v46 = vmul.f32 %v45, 0.6931472
    %v47 = vmul.f32 %v38, %v46
    %v48 = vlog2.pop %v40
    %v49 = vmul.f32 %v48, 0.6931472
    %v50 = vmul.f32 %v40, %v49
    %v51 = vadd.f32 %v47, %v50
    %v52 = vmul.f32 %v41, %v44
    %v53 = vsub.f32 %v51, %v52
    %v54 = vadd.f32 %v53, 0.0
    %v55 = vadd.f32 %v54, 0.0
    %v56 = vlaneseq
    %vm57 = vcmp.ge.s32.totalorder %v56, 0
    %vm58 = vcmp.lt.s32.totalorder %v56, 512
    %vm59 = vmand %vm57, %vm58
    %60 = vst.msk [vmem:[#allocation7] sm:$0xf] %vm59, %v55
    // Predicated region
    $region18: #{tpu_custom_call.1} parent=1 // pred_check
      _
    $region19: #{tpu_custom_call.1} parent=1 // pred_check_branch
      %62 = sbr.rel (0) target = $region21
    $region20: #{tpu_custom_call.1} parent=1 // pred_region
      %s64 = ssub.s32 64, 64
      %65 = vsyncadd [#allocation4], %s64
      %s67 = sshll.u32 [#allocation7], 4
      %s68 = int_to_ptr.vmem [resolvable:$true] %s67
      %70 = dma.vmem_to_hbm [thread:$0]  %s68, 64, %s2, [#allocation4]
    $region21: #{tpu_custom_call.1} parent=1 // pred_fallthru
      _
    // Predicated region
    $region22: #{tpu_custom_call.1} parent=1 // pred_check
      _
    $region23: #{tpu_custom_call.1} parent=1 // pred_check_branch
      %72 = sbr.rel (0) target = $region25
    $region24: #{tpu_custom_call.1} parent=1 // pred_region
      %73 = dma.done [#allocation4], 64
    $region25: #{tpu_custom_call.1} parent=1 // pred_fallthru
      _
    %74 = vsyncpa [#allocation3], 1
    %75 = vsyncpa [#allocation6], 1
    %76 = vsyncpa [#allocation4], 1

</llo_original>
